<compile_context>
chip_gen: v5e
topology: v5e:2x2
jax: 0.10.0
libtpu: 0.0.40
codegen_flags: <defaults>
</compile_context>

<pallas_src>
import jax
import jax.numpy as jnp
from jax.experimental import pallas as pl
from jax.experimental.pallas import tpu as pltpu


def _cdiv(a: int, b: int) -> int:
    return -(-a // b)


def _ru16(n: int) -> int:
    return ((n + 15) // 16) * 16


def _choose_tile_b(B: int, max_tile_b: int = 2048) -> int:
    """Batch (lane-axis) tile.

    - Large batches: cap at max_tile_b (multiple of 128).
    - Medium batches (>256): split into >= 2 lane-aligned tiles so both v7x
      TensorCores get work via the "parallel" grid axis.
    - Small batches: one full-extent tile (full-dim blocks need no 128-multiple).
    """
    if B >= 2 * max_tile_b:
        return max_tile_b
    if B > 256:
        return max(128, 128 * _cdiv(_cdiv(B, 2), 128))
    return B


def pack_criticq_params(params, in_dim: int, mid_dim: int):
    """Pack parameters for the batch-on-lanes kernel.

    Returns:
      packed_w: bf16 (3*rs, lw) -- rows [k*rs : k*rs+mid) hold layer k's weight
                transposed to (out, in); lw = max(in_dim, mid_dim); rs is
                mid_dim rounded to the bf16 sublane tile (16).
      vec:      f32 (mid_dim, 8) -- col 0..2 = bh0, bh1, bq0 (as columns that
                broadcast over batch lanes); col 3 = final (mid->1) weight
                column; [0, 4] = final scalar bias.
    """
    (wh0, bh0), (wh1, bh1), (wq0, bq0), (wq1, bq1) = params
    assert mid_dim % 8 == 0, "mid_dim must be a multiple of 8 for clean TPU layout"
    lw = max(in_dim, mid_dim)
    rs = _ru16(mid_dim)

    def pad_to(a, rows, cols):
        return jnp.pad(a, ((0, rows - a.shape[0]), (0, cols - a.shape[1])))

    packed_w = jnp.concatenate(
        [pad_to(wh0.T, rs, lw),      # (mid, in_dim) -> (rs, lw)
         pad_to(wh1.T, rs, lw),      # (mid, mid)    -> (rs, lw)
         pad_to(wq0.T, rs, lw)],     # (mid, mid)    -> (rs, lw)
        axis=0).astype(jnp.bfloat16)
    assert packed_w.shape == (3 * rs, lw)

    vec = jnp.zeros((mid_dim, 8), jnp.float32)
    vec = vec.at[:, 0].set(bh0.reshape(-1))
    vec = vec.at[:, 1].set(bh1.reshape(-1))
    vec = vec.at[:, 2].set(bq0.reshape(-1))
    vec = vec.at[:, 3].set(wq1.reshape(-1))     # final-layer weight column
    vec = vec.at[0, 4].set(bq1[0, 0])           # final-layer scalar bias
    return packed_w, vec


def _make_criticq_kernel(in_dim: int, mid_dim: int):
    rs = _ru16(mid_dim)   # sublane-aligned section height inside packed_w

    def kernel(xT_ref, w_ref, v_ref, o_ref):
        x = xT_ref[...]                                     # (in_dim, TB) bf16

        w_h0 = w_ref[0 * rs:0 * rs + mid_dim, 0:in_dim]     # (mid, in) bf16
        w_h1 = w_ref[1 * rs:1 * rs + mid_dim, 0:mid_dim]    # (mid, mid) bf16
        w_q0 = w_ref[2 * rs:2 * rs + mid_dim, 0:mid_dim]    # (mid, mid) bf16

        b_h0 = v_ref[:, 0:1]                                 # (mid, 1) f32
        b_h1 = v_ref[:, 1:2]
        b_q0 = v_ref[:, 2:3]
        w_q1 = v_ref[:, 3:4]                                 # (mid, 1) f32
        b_q1 = v_ref[0:1, 4:5]                               # (1, 1)   f32

        f32 = jnp.float32
        bf16 = jnp.bfloat16
        # net_head: Linear -> ReLU -> Linear -> ReLU   (batch on lanes)
        h = jnp.maximum(
            jnp.dot(w_h0, x, preferred_element_type=f32) + b_h0, 0.0)
        m = jnp.maximum(
            jnp.dot(w_h1, h.astype(bf16), preferred_element_type=f32) + b_h1, 0.0)
        # net_q1: Linear -> ReLU -> Linear(mid -> 1)
        q = jnp.maximum(
            jnp.dot(w_q0, m.astype(bf16), preferred_element_type=f32) + b_q0, 0.0)
        # Final mid->1 layer in f32 on VPU (multiply) + XLU sublane reduce;
        # result is a lane-dense (1, TB) row.
        o_ref[...] = jnp.sum(q * w_q1, axis=0, keepdims=True) + b_q1

    return kernel


def criticq_forward(value, packed_w, vec_params, *, max_tile_b=2048):
    """value: (B, state_dim + action_dim) f32 -> (B, 1) f32."""
    B, in_dim = value.shape
    mid_dim = vec_params.shape[0]
    TB = _choose_tile_b(B, max_tile_b)
    n_tiles = _cdiv(B, TB)

    # Batch-on-lanes: feed x^T (layout plumbing) and halve the HBM stream with
    # a bf16 cast.  No padding / slicing of the batch: the ragged last block is
    # handled by the grid (garbage lanes never cross lanes, OOB writes masked).
    xT = value.T.astype(jnp.bfloat16)                       # (in_dim, B)

    kernel = _make_criticq_kernel(in_dim, mid_dim)
    out = pl.pallas_call(
        kernel,
        out_shape=jax.ShapeDtypeStruct((1, B), jnp.float32),
        grid=(n_tiles,),
        in_specs=[
            # batch tile, pipelined/double-buffered across the grid
            pl.BlockSpec((in_dim, TB), lambda i: (0, i)),
            # packed bf16 weights: constant block -> VMEM-resident
            pl.BlockSpec(packed_w.shape, lambda i: (0, 0)),
            # f32 biases / final-layer column: constant block -> VMEM-resident
            pl.BlockSpec(vec_params.shape, lambda i: (0, 0)),
        ],
        out_specs=pl.BlockSpec((1, TB), lambda i: (0, i)),   # lane-dense output
        compiler_params=pltpu.CompilerParams(
            dimension_semantics=("parallel",)),
    )(xT, packed_w, vec_params)
    return out.reshape(B, 1)


def _init_linear(key, fan_in, fan_out):
    """PyTorch-style uniform(-1/sqrt(fan_in), 1/sqrt(fan_in)); W stored (in, out)."""
    kw, kb = jax.random.split(key)
    bound = 1.0 / jnp.sqrt(jnp.float32(fan_in))
    w = jax.random.uniform(kw, (fan_in, fan_out), jnp.float32, -bound, bound)
    b = jax.random.uniform(kb, (1, fan_out), jnp.float32, -bound, bound)
    return w, b


def init_criticq_params(key, mid_dim, state_dim, action_dim):
    k0, k1, k2, k3 = jax.random.split(key, 4)
    in_dim = state_dim + action_dim
    return (
        _init_linear(k0, in_dim, mid_dim),    # net_head[0]
        _init_linear(k1, mid_dim, mid_dim),   # net_head[2]
        _init_linear(k2, mid_dim, mid_dim),   # net_q1[0]
        _init_linear(k3, mid_dim, 1),         # net_q1[2]
    )


def criticq_reference_f32(value, params):
    (wh0, bh0), (wh1, bh1), (wq0, bq0), (wq1, bq1) = params
    hp = jax.lax.Precision.HIGHEST
    h = jnp.maximum(jnp.dot(value, wh0, precision=hp) + bh0, 0.0)
    mid = jnp.maximum(jnp.dot(h, wh1, precision=hp) + bh1, 0.0)
    q = jnp.maximum(jnp.dot(mid, wq0, precision=hp) + bq0, 0.0)
    return jnp.dot(q, wq1, precision=hp) + bq1


def criticq_reference_bf16(value, params):
    """Reference matching the kernel's numerics: bf16 MXU operands, f32 acc,
    f32 bias/ReLU, f32 final layer."""
    (wh0, bh0), (wh1, bh1), (wq0, bq0), (wq1, bq1) = params
    bf = jnp.bfloat16

    def mm(a, w):
        return jnp.dot(a.astype(bf), w.astype(bf),
                       preferred_element_type=jnp.float32)

    h = jnp.maximum(mm(value, wh0) + bh0, 0.0)
    mid = jnp.maximum(mm(h, wh1) + bh1, 0.0)
    q = jnp.maximum(mm(mid, wq0) + bq0, 0.0)
    return jnp.dot(q, wq1, precision=jax.lax.Precision.HIGHEST) + bq1


if __name__ == "__main__":
    mid_dim, state_dim, action_dim = 32, 12, 4
    in_dim = state_dim + action_dim

    key = jax.random.PRNGKey(0)
    k_params, k_v1, k_v2 = jax.random.split(key, 3)
    params = init_criticq_params(k_params, mid_dim, state_dim, action_dim)
    packed_w, vec_params = pack_criticq_params(params, in_dim, mid_dim)

    # Small single-tile batch and a multi-tile ragged batch (exercises the grid
    # + masked last-block path).  NOTE: forward() only uses net_head + net_q1
    # (net_q2 / get_q1_q2 are not part of forward and are not implemented).
    for batch, kv in ((8, k_v1), (300, k_v2)):
        value = jax.random.normal(kv, (batch, in_dim), jnp.float32)
        out = jax.block_until_ready(
            criticq_forward(value, packed_w, vec_params))
        assert out.shape == (batch, 1)

        ref_bf = criticq_reference_bf16(value, params)
        ref_f32 = criticq_reference_f32(value, params)
        # Tight check vs. a reference with identical bf16-operand numerics.
        assert jnp.allclose(out, ref_bf, atol=2e-3, rtol=2e-3), (
            float(jnp.max(jnp.abs(out - ref_bf))))
        # Loose sanity check vs. the full-f32 reference (bf16 operand rounding).
        assert jnp.allclose(out, ref_f32, atol=1e-1, rtol=1e-1), (
            float(jnp.max(jnp.abs(out - ref_f32))))

    print("KERNEL_OK")
</pallas_src>

<mosaic_0001>
module attributes {stable_mosaic.version = 11 : i64} {
  func.func @kernel(%arg0: i32, %arg1: memref<16x8xbf16, #tpu.memory_space<vmem>>, %arg2: memref<96x32xbf16, #tpu.memory_space<vmem>>, %arg3: memref<32x8xf32, #tpu.memory_space<vmem>>, %arg4: memref<1x8xf32, #tpu.memory_space<vmem>>) attributes {dimension_semantics = [#tpu.dimension_semantics<parallel>], iteration_bounds = array<i64: 1>, scalar_prefetch = 0 : i64, scratch_operands = 0 : i64, tpu.core_type = #tpu.core_type<tc>, window_params = [{transform_indices = @transform_0, window_bounds = array<i64: 16, 8>}, {pipeline_mode = #tpu.pipeline_mode<synchronous>, transform_indices = @transform_1, window_bounds = array<i64: 96, 32>}, {pipeline_mode = #tpu.pipeline_mode<synchronous>, transform_indices = @transform_2, window_bounds = array<i64: 32, 8>}, {transform_indices = @transform_3, window_bounds = array<i64: 1, 8>}]} {
    %c0 = arith.constant 0 : index
    %c0_0 = arith.constant 0 : index
    %0 = vector.load %arg1[%c0, %c0_0] : memref<16x8xbf16, #tpu.memory_space<vmem>>, vector<16x8xbf16>
    %c0_1 = arith.constant 0 : index
    %c0_2 = arith.constant 0 : index
    %1 = vector.load %arg2[%c0_1, %c0_2] : memref<96x32xbf16, #tpu.memory_space<vmem>>, vector<32x16xbf16>
    %c32 = arith.constant 32 : index
    %c0_3 = arith.constant 0 : index
    %2 = vector.load %arg2[%c32, %c0_3] : memref<96x32xbf16, #tpu.memory_space<vmem>>, vector<32x32xbf16>
    %c64 = arith.constant 64 : index
    %c0_4 = arith.constant 0 : index
    %3 = vector.load %arg2[%c64, %c0_4] : memref<96x32xbf16, #tpu.memory_space<vmem>>, vector<32x32xbf16>
    %c0_5 = arith.constant 0 : index
    %c0_6 = arith.constant 0 : index
    %4 = vector.load %arg3[%c0_5, %c0_6] : memref<32x8xf32, #tpu.memory_space<vmem>>, vector<32x1xf32>
    %c0_7 = arith.constant 0 : index
    %c1 = arith.constant 1 : index
    %5 = vector.load %arg3[%c0_7, %c1] : memref<32x8xf32, #tpu.memory_space<vmem>>, vector<32x1xf32>
    %c0_8 = arith.constant 0 : index
    %c2 = arith.constant 2 : index
    %6 = vector.load %arg3[%c0_8, %c2] : memref<32x8xf32, #tpu.memory_space<vmem>>, vector<32x1xf32>
    %c0_9 = arith.constant 0 : index
    %c3 = arith.constant 3 : index
    %7 = vector.load %arg3[%c0_9, %c3] : memref<32x8xf32, #tpu.memory_space<vmem>>, vector<32x1xf32>
    %c0_10 = arith.constant 0 : index
    %c4 = arith.constant 4 : index
    %8 = vector.load %arg3[%c0_10, %c4] : memref<32x8xf32, #tpu.memory_space<vmem>>, vector<1x1xf32>
    %cst = arith.constant dense<0.000000e+00> : vector<32x8xf32>
    %9 = tpu.matmul %1, %0, %cst {dimension_numbers = #tpu.dot_dimension_numbers<[1], [0], [0], [1], [0, 0, 1, 1], [], []>} : vector<32x16xbf16>, vector<16x8xbf16>, vector<32x8xf32> -> vector<32x8xf32>
    %10 = vector.broadcast %4 : vector<32x1xf32> to vector<32x8xf32>
    %11 = arith.addf %9, %10 : vector<32x8xf32>
    %cst_11 = arith.constant 0.000000e+00 : f32
    %12 = vector.broadcast %cst_11 : f32 to vector<32x8xf32>
    %13 = arith.maximumf %11, %12 : vector<32x8xf32>
    %14 = arith.truncf %13 : vector<32x8xf32> to vector<32x8xbf16>
    %cst_12 = arith.constant dense<0.000000e+00> : vector<32x8xf32>
    %15 = tpu.matmul %2, %14, %cst_12 {dimension_numbers = #tpu.dot_dimension_numbers<[1], [0], [0], [1], [0, 0, 1, 1], [], []>} : vector<32x32xbf16>, vector<32x8xbf16>, vector<32x8xf32> -> vector<32x8xf32>
    %16 = vector.broadcast %5 : vector<32x1xf32> to vector<32x8xf32>
    %17 = arith.addf %15, %16 : vector<32x8xf32>
    %cst_13 = arith.constant 0.000000e+00 : f32
    %18 = vector.broadcast %cst_13 : f32 to vector<32x8xf32>
    %19 = arith.maximumf %17, %18 : vector<32x8xf32>
    %20 = arith.truncf %19 : vector<32x8xf32> to vector<32x8xbf16>
    %cst_14 = arith.constant dense<0.000000e+00> : vector<32x8xf32>
    %21 = tpu.matmul %3, %20, %cst_14 {dimension_numbers = #tpu.dot_dimension_numbers<[1], [0], [0], [1], [0, 0, 1, 1], [], []>} : vector<32x32xbf16>, vector<32x8xbf16>, vector<32x8xf32> -> vector<32x8xf32>
    %22 = vector.broadcast %6 : vector<32x1xf32> to vector<32x8xf32>
    %23 = arith.addf %21, %22 : vector<32x8xf32>
    %cst_15 = arith.constant 0.000000e+00 : f32
    %24 = vector.broadcast %cst_15 : f32 to vector<32x8xf32>
    %25 = arith.maximumf %23, %24 : vector<32x8xf32>
    %26 = vector.broadcast %7 : vector<32x1xf32> to vector<32x8xf32>
    %27 = arith.mulf %25, %26 : vector<32x8xf32>
    %cst_16 = arith.constant dense<0.000000e+00> : vector<8xf32>
    %28 = vector.multi_reduction <add>, %27, %cst_16 [0] : vector<32x8xf32> to vector<8xf32>
    %29 = vector.shape_cast %28 : vector<8xf32> to vector<1x8xf32>
    %30 = vector.broadcast %8 : vector<1x1xf32> to vector<1x8xf32>
    %31 = arith.addf %29, %30 : vector<1x8xf32>
    %c0_17 = arith.constant 0 : index
    %c0_18 = arith.constant 0 : index
    %32 = vector.load %arg4[%c0_17, %c0_18] : memref<1x8xf32, #tpu.memory_space<vmem>>, vector<1x8xf32>
    tpu.vector_store %arg4[%c0_17, %c0_18], %31 {strides = array<i32>} : memref<1x8xf32, #tpu.memory_space<vmem>>, vector<1x8xf32>,
    return
  }
  func.func @transform_0(%arg0: i32) -> (i32, i32) {
    %c0_i32 = arith.constant 0 : i32
    %c0_i32_0 = arith.constant 0 : i32
    return %c0_i32, %arg0 : i32, i32
  }
  func.func @transform_1(%arg0: i32) -> (i32, i32) {
    %c0_i32 = arith.constant 0 : i32
    %c0_i32_0 = arith.constant 0 : i32
    %c0_i32_1 = arith.constant 0 : i32
    return %c0_i32, %c0_i32_0 : i32, i32
  }
  func.func @transform_2(%arg0: i32) -> (i32, i32) {
    %c0_i32 = arith.constant 0 : i32
    %c0_i32_0 = arith.constant 0 : i32
    %c0_i32_1 = arith.constant 0 : i32
    return %c0_i32, %c0_i32_0 : i32, i32
  }
  func.func @transform_3(%arg0: i32) -> (i32, i32) {
    %c0_i32 = arith.constant 0 : i32
    %c0_i32_0 = arith.constant 0 : i32
    return %c0_i32, %arg0 : i32, i32
  }
}

</mosaic_0001>

<llo_original>
// kernel: tpu_custom_call.1
$region0: #{tpu_custom_call.1}
  #allocation0 [shape = 'u32[]', space=smem, size = 0x4, offset = 0x4, fixed_abs, tag = 'smem constant byte address 0x4 - core index']
  #allocation1 [shape = 'u32[72,128]{1,0:T(1,128)}', space=vmem, size = 0x9000, scoped, tag = 'internal scratch']
  %s0 = inlined_call_operand.vmem [shape: bf16[16,8], index: 0, kind: input, shape index: {}]
  %s1 = inlined_call_operand.vmem [shape: bf16[96,32], index: 1, kind: input, shape index: {}]
  %s2 = inlined_call_operand.vmem [shape: f32[32,8], index: 2, kind: input, shape index: {}]
  %s3 = inlined_call_operand.hbm [shape: f32[1,8], index: 3, kind: output, shape index: {}]
  %s4 = sld [smem:[#allocation0]]
  $region22: #{tpu_custom_call.1} parent=0
    _
  %s6 = ssub.s32 1, %s4
  %s7 = scalar_select 0, %s6, %s4
  $region1: #{tpu_custom_call.1} parent=0
    #allocation2 [shape = 'u8[512]{0}', space=vmem, size = 0x400, scoped, tag = 'output window, operand 0, single buffered']
    #allocation3 [shape = 's32[1]{0}', space=sflag, size = 0x4, scoped, tag = 'scoped memory for tpu_custom_call.1']
    %8 = vsyncpa [#allocation3], 0
    // Predicated region
    $region2: #{tpu_custom_call.1} parent=1 // pred_check
      _
    $region3: #{tpu_custom_call.1} parent=1 // pred_check_branch
      %10 = sbr.rel (0) target = $region5
    $region4: #{tpu_custom_call.1} parent=1 // pred_region
      _
    $region5: #{tpu_custom_call.1} parent=1 // pred_fallthru
      _
    // Predicated region
    $region6: #{tpu_custom_call.1} parent=1 // pred_check
      _
    $region7: #{tpu_custom_call.1} parent=1 // pred_check_branch
      %12 = sbr.rel (0) target = $region9
    $region8: #{tpu_custom_call.1} parent=1 // pred_region
      _
    $region9: #{tpu_custom_call.1} parent=1 // pred_fallthru
      _
    // Predicated region
    $region10: #{tpu_custom_call.1} parent=1 // pred_check
      _
    $region11: #{tpu_custom_call.1} parent=1 // pred_check_branch
      %14 = sbr.rel (0) target = $region13
    $region12: #{tpu_custom_call.1} parent=1 // pred_region
      _
    $region13: #{tpu_custom_call.1} parent=1 // pred_fallthru
      _
    %v16 = vld [vmem:[%s0] sm:$0xf]
    %v17 = vld [vmem:[%s0 + $0x4] sm:$0xf]
    %v18 = vld [vmem:[%s1] sm:$0xf]
    %v19 = vld [vmem:[%s1 + $0x4] sm:$0xf]
    %v20 = vld [vmem:[%s1 + $0x8] sm:$0xf]
    %v21 = vld [vmem:[%s1 + $0xc] sm:$0xf]
    %v22 = vld [vmem:[%s1 + $0x10] sm:$0xf]
    %v23 = vld [vmem:[%s1 + $0x14] sm:$0xf]
    %v24 = vld [vmem:[%s1 + $0x18] sm:$0xf]
    %v25 = vld [vmem:[%s1 + $0x1c] sm:$0xf]
    %v26 = vld [vmem:[%s1 + $0x20] sm:$0xf]
    %v27 = vld [vmem:[%s1 + $0x24] sm:$0xf]
    %v28 = vld [vmem:[%s1 + $0x28] sm:$0xf]
    %v29 = vld [vmem:[%s1 + $0x2c] sm:$0xf]
    %v30 = vld [vmem:[%s2] sm:$0xff]
    %v31 = vld [vmem:[%s2 + $0x8] sm:$0xff]
    %v32 = vld [vmem:[%s2 + $0x10] sm:$0xff]
    %v33 = vld [vmem:[%s2 + $0x18] sm:$0xff]
    %v34 = vld [vmem:[%s2] sm:$0x1]
    %36 = vset.pattern.permute.xlu0 0
    %37 = vperm.xlu0 %36, %v30
    %v38 = vpop.permute.xlu0 %37
    %41 = vset.pattern.permute.xlu0 0
    %42 = vperm.xlu0 %41, %v31
    %v43 = vpop.permute.xlu0 %42
    %46 = vset.pattern.permute.xlu0 0
    %47 = vperm.xlu0 %46, %v32
    %v48 = vpop.permute.xlu0 %47
    %51 = vset.pattern.permute.xlu0 0
    %52 = vperm.xlu0 %51, %v33
    %v53 = vpop.permute.xlu0 %52
    %v59 = vunpack.c.l.b16 %v18
    %v60 = vunpack.c.l.b16 %v19
    %v61 = vunpack.c.l.b16 %v20
    %v62 = vunpack.c.l.b16 %v21
    %v63 = vpack.c.b16 %v60, %v59
    %v64 = vpack.c.b16 %v62, %v61
    %v67 = vunpack.c.l.b16 %v16
    %v68 = vunpack.c.l.b16 %v17
    %v69 = vpack.c.b16 %v68, %v67
    %vm71 = vcmask 130048
    %v73 = vsel %vm71, %v63, 0
    %v76 = vsel %vm71, %v64, 0
    %78 = vmatpush.bf16.msra.mxu0 0
    %79 = vmatpush.bf16.msra.mxu0 0
    %80 = vmatpush.bf16.msra.mxu0 0
    %81 = vmatpush.bf16.msra.mxu0 0
    %82 = vmatpush.bf16.msra.mxu0 0
    %83 = vmatpush.bf16.msra.mxu0 0
    %84 = vmatpush.bf16.msra.mxu0 0
    %85 = vmatpush.bf16.msra.mxu0 %v69
    %86 = vmatmul.bf16.gmra.mxu0 %v73
    %v87 = vpop.f32.mrf.mxu0
    %v88 = vadd.f32 %v38, %v87
    %v89 = vpop.f32.mrf.mxu0
    %v90 = vadd.f32 %v43, %v89
    %91 = vmatmul.bf16.gmra.mxu0 %v76
    %v92 = vpop.f32.mrf.mxu0
    %v93 = vadd.f32 %v48, %v92
    %v94 = vpop.f32.mrf.mxu0
    %v95 = vadd.f32 %v53, %v94
    %96 = vdwg.mxu0
    %v97 = vmax.f32 %v88, 0.0
    %v98 = vmax.f32 %v90, 0.0
    %v99 = vmax.f32 %v93, 0.0
    %v100 = vmax.f32 %v95, 0.0
    %v101 = vpack.c.bf16 %v98, %v97
    %v102 = vpack.c.bf16 %v100, %v99
    %103 = vset.pattern.permute.xlu0 1
    %104 = vperm.xlu0 %103, %v30
    %v105 = vpop.permute.xlu0 %104
    %107 = vset.pattern.permute.xlu0 1
    %108 = vperm.xlu0 %107, %v31
    %v109 = vpop.permute.xlu0 %108
    %111 = vset.pattern.permute.xlu0 1
    %112 = vperm.xlu0 %111, %v32
    %v113 = vpop.permute.xlu0 %112
    %115 = vset.pattern.permute.xlu0 1
    %116 = vperm.xlu0 %115, %v33
    %v117 = vpop.permute.xlu0 %116
    %v123 = vunpack.c.l.b16 %v22
    %v124 = vunpack.c.l.b16 %v23
    %v125 = vunpack.c.l.b16 %v24
    %v126 = vunpack.c.l.b16 %v25
    %v127 = vpack.c.b16 %v124, %v123
    %v128 = vpack.c.b16 %v126, %v125
    %vm129 = vcmask 261120
    %v131 = vsel %vm129, %v127, 0
    %v134 = vsel %vm129, %v128, 0
    %136 = vmatpush.bf16.msra.mxu0 0
    %137 = vmatpush.bf16.msra.mxu0 0
    %138 = vmatpush.bf16.msra.mxu0 0
    %139 = vmatpush.bf16.msra.mxu0 0
    %140 = vmatpush.bf16.msra.mxu0 0
    %141 = vmatpush.bf16.msra.mxu0 0
    %142 = vmatpush.bf16.msra.mxu0 %v102
    %143 = vmatpush.bf16.msra.mxu0 %v101
    %144 = vmatmul.bf16.gmra.mxu0 %v131
    %v145 = vpop.f32.mrf.mxu0
    %v146 = vadd.f32 %v105, %v145
    %v147 = vpop.f32.mrf.mxu0
    %v148 = vadd.f32 %v109, %v147
    %149 = vmatmul.bf16.gmra.mxu0 %v134
    %v150 = vpop.f32.mrf.mxu0
    %v151 = vadd.f32 %v113, %v150
    %v152 = vpop.f32.mrf.mxu0
    %v153 = vadd.f32 %v117, %v152
    %154 = vdwg.mxu0
    %v155 = vmax.f32 %v146, 0.0
    %v156 = vmax.f32 %v148, 0.0
    %v157 = vmax.f32 %v151, 0.0
    %v158 = vmax.f32 %v153, 0.0
    %v159 = vpack.c.bf16 %v156, %v155
    %v160 = vpack.c.bf16 %v158, %v157
    %161 = vset.pattern.permute.xlu0 2
    %162 = vperm.xlu0 %161, %v30
    %v163 = vpop.permute.xlu0 %162
    %165 = vset.pattern.permute.xlu0 2
    %166 = vperm.xlu0 %165, %v31
    %v167 = vpop.permute.xlu0 %166
    %169 = vset.pattern.permute.xlu0 2
    %170 = vperm.xlu0 %169, %v32
    %v171 = vpop.permute.xlu0 %170
    %173 = vset.pattern.permute.xlu0 2
    %174 = vperm.xlu0 %173, %v33
    %v175 = vpop.permute.xlu0 %174
    %v181 = vunpack.c.l.b16 %v26
    %v182 = vunpack.c.l.b16 %v27
    %v183 = vunpack.c.l.b16 %v28
    %v184 = vunpack.c.l.b16 %v29
    %v185 = vpack.c.b16 %v182, %v181
    %v186 = vpack.c.b16 %v184, %v183
    %v188 = vsel %vm129, %v185, 0
    %v191 = vsel %vm129, %v186, 0
    %193 = vmatpush.bf16.msra.mxu0 0
    %194 = vmatpush.bf16.msra.mxu0 0
    %195 = vmatpush.bf16.msra.mxu0 0
    %196 = vmatpush.bf16.msra.mxu0 0
    %197 = vmatpush.bf16.msra.mxu0 0
    %198 = vmatpush.bf16.msra.mxu0 0
    %199 = vmatpush.bf16.msra.mxu0 %v160
    %200 = vmatpush.bf16.msra.mxu0 %v159
    %201 = vmatmul.bf16.gmra.mxu0 %v188
    %v202 = vpop.f32.mrf.mxu0
    %v203 = vadd.f32 %v163, %v202
    %v204 = vpop.f32.mrf.mxu0
    %v205 = vadd.f32 %v167, %v204
    %206 = vmatmul.bf16.gmra.mxu0 %v191
    %v207 = vpop.f32.mrf.mxu0
    %v208 = vadd.f32 %v171, %v207
    %v209 = vpop.f32.mrf.mxu0
    %v210 = vadd.f32 %v175, %v209
    %211 = vdwg.mxu0
    %v212 = vmax.f32 %v203, 0.0
    %v213 = vmax.f32 %v205, 0.0
    %v214 = vmax.f32 %v208, 0.0
    %v215 = vmax.f32 %v210, 0.0
    %216 = vset.pattern.permute.xlu0 3
    %217 = vperm.xlu0 %216, %v30
    %v218 = vpop.permute.xlu0 %217
    %220 = vset.pattern.permute.xlu0 3
    %221 = vperm.xlu0 %220, %v31
    %v222 = vpop.permute.xlu0 %221
    %224 = vset.pattern.permute.xlu0 3
    %225 = vperm.xlu0 %224, %v32
    %v226 = vpop.permute.xlu0 %225
    %228 = vset.pattern.permute.xlu0 3
    %229 = vperm.xlu0 %228, %v33
    %v230 = vpop.permute.xlu0 %229
    %v232 = vmul.f32 %v212, %v218
    %v233 = vmul.f32 %v213, %v222
    %v234 = vmul.f32 %v214, %v226
    %v235 = vmul.f32 %v215, %v230
    %vm236 = vcmask 64512
    %v237 = vsel %vm236, %v232, 0.0
    %v238 = vsel %vm236, %v233, 0.0
    %v239 = vadd.f32 %v237, %v238
    %v240 = vsel %vm236, %v234, 0.0
    %v241 = vadd.f32 %v239, %v240
    %v242 = vsel %vm236, %v235, 0.0
    %v243 = vadd.f32 %v241, %v242
    %v244 = vrot.slane %v243, 4
    %v245 = vadd.f32 %v243, %v244
    %v246 = vrot.slane %v245, 2
    %v247 = vadd.f32 %v245, %v246
    %v248 = vrot.slane %v247, 1
    %v249 = vadd.f32 %v247, %v248
    %251 = vset.pattern.permute.xlu0 4
    %252 = vperm.xlu0 %251, %v34
    %v253 = vpop.permute.xlu0 %252
    %v255 = vadd.f32 %v249, %v253
    %vm256 = vcmask 57344
    %257 = vst.msk [vmem:[#allocation2] sm:$0x1] %vm256, %v255
    // Predicated region
    $region14: #{tpu_custom_call.1} parent=1 // pred_check
      _
    $region15: #{tpu_custom_call.1} parent=1 // pred_check_branch
      %259 = sbr.rel (0) target = $region17
    $region16: #{tpu_custom_call.1} parent=1 // pred_region
      %261 = vsyncadd [#allocation3], 0
      %s263 = sshll.u32 [#allocation2], 4
      %s264 = int_to_ptr.vmem [resolvable:$true] %s263
      %s265 = sshll.u32 %s3, 4
      %s266 = int_to_ptr.hbm [resolvable:$true] %s265
      %268 = dma.vmem_to_hbm [thread:$0]  %s264, 16, %s266, [#allocation3]
    $region17: #{tpu_custom_call.1} parent=1 // pred_fallthru
      _
    // Predicated region
    $region18: #{tpu_custom_call.1} parent=1 // pred_check
      _
    $region19: #{tpu_custom_call.1} parent=1 // pred_check_branch
      %270 = sbr.rel (0) target = $region21
    $region20: #{tpu_custom_call.1} parent=1 // pred_region
      %272 = dma.done [#allocation3], 16
    $region21: #{tpu_custom_call.1} parent=1 // pred_fallthru
      _
    %273 = vsyncpa [#allocation3], 1

</llo_original>
